<compile_context>
chip_gen: v7x
topology: tpu7x:2x2x1
jax: 0.10.0
libtpu: 0.0.40
codegen_flags: <defaults>
</compile_context>

<pallas_src>
import functools

import jax
import jax.numpy as jnp
from jax import lax
from jax.experimental import pallas as pl
from jax.experimental.pallas import tpu as pltpu

EPS = 1e-8


def _round_up(x, m):
    return ((x + m - 1) // m) * m


def _vmem_budgets():
    """(tile budget, vmem_limit_bytes) tuned per TPU generation."""
    phys = 64 << 20  # conservative fallback (v7x-sized)
    try:
        phys = int(getattr(pltpu.get_tpu_info(), "vmem_capacity_bytes", phys))
    except Exception:
        pass
    if phys >= (96 << 20):          # v5e / v6e: 128 MiB physical VMEM
        return 56 << 20, 96 << 20
    # v7x: 64 MiB physical VMEM — do NOT reuse the v6e-sized budget.
    return 28 << 20, min(48 << 20, phys)


def _choose_row_tile(batch, d_chunk, itemsize, budget):
    """Largest row tile whose per-grid-step working set fits the VMEM budget.

    Per step: 2 inputs x 2 pipeline buffers of (tb, d_chunk) in storage dtype,
    plus ~3 live f32 (tb, d_chunk) temporaries (x, y, one product at a time).
    """
    bytes_per_row = d_chunk * (4 * itemsize + 12)
    tile = max(int(budget // max(bytes_per_row, 1)), 8)
    # Keep >= 2 row tiles for larger batches so both v7x TensorCores get work
    # on the "parallel" row axis (extra grid step is noise on 1-TC v5e/v6e).
    if batch >= 256:
        tile = min(tile, _round_up(pl.cdiv(batch, 2), 128))
    if tile >= batch:
        return batch
    if batch >= 128:
        return max(128, (tile // 128) * 128)   # lane-dense output slab
    return max(8, (tile // 8) * 8)


def _ccc_stats_kernel(x_ref, y_ref, o_ref, *, batch, d, row_tile, d_chunk):
    """Accumulate per-row raw moments of one (tb, dc) block into o_ref.

    o_ref block is (1, 8, tb), lane-dense; rows = [sx, sy, sxx, syy, sxy, 0,0,0].
    """
    j = pl.program_id(1)
    tb = x_ref.shape[0]

    @pl.when(j == 0)
    def _init():
        o_ref[...] = jnp.zeros(o_ref.shape, o_ref.dtype)

    xf = x_ref[...].astype(jnp.float32)        # (tb, dc) — bf16 streams upcast here
    yf = y_ref[...].astype(jnp.float32)

    # Ragged D tail: zero out-of-range columns before they touch the sums.
    if d % d_chunk != 0:
        valid_d = d - j * d_chunk
        col = lax.broadcasted_iota(jnp.int32, (1, d_chunk), 1)
        keep = col < valid_d
        xf = jnp.where(keep, xf, 0.0)
        yf = jnp.where(keep, yf, 0.0)

    sx = jnp.sum(xf, axis=1)                   # (tb,)
    sy = jnp.sum(yf, axis=1)
    sxx = jnp.sum(xf * xf, axis=1)
    syy = jnp.sum(yf * yf, axis=1)
    sxy = jnp.sum(xf * yf, axis=1)

    slab = jnp.concatenate(
        [sx[None, :], sy[None, :], sxx[None, :], syy[None, :], sxy[None, :],
         jnp.zeros((3, tb), jnp.float32)],
        axis=0)                                # (8, tb) — single full-width store

    # Ragged row tail (no host-side padding): zero stats of out-of-range rows.
    if batch % row_tile != 0:
        valid_b = batch - pl.program_id(0) * row_tile
        lane = lax.broadcasted_iota(jnp.int32, (1, tb), 1)
        slab = jnp.where(lane < valid_b, slab, 0.0)

    o_ref[0, :, :] += slab


def concordance_cc_loss(inputs, targets, *, eps=EPS, row_tile=None, d_chunk=None):
    """Pallas TPU implementation of ConcordanceCCLoss.forward.

    inputs, targets: (B, D) arrays.  Keep them in their narrow storage dtype
    (e.g. bf16) — the kernel is HBM-bandwidth bound and upcasts to f32
    internally, so halving the input bytes is a near-2x end-to-end win.
    Returns (B,) float32 loss.
    """
    assert inputs.shape == targets.shape and inputs.ndim == 2
    B, D = inputs.shape
    itemsize = jnp.dtype(inputs.dtype).itemsize

    # --- D chunk (lane) size: full D when small, 2048-lane chunks otherwise.
    if d_chunk is None:
        dc = D if D <= 2048 else 2048
    else:
        dc = max(1, min(int(d_chunk), D))
    if dc < D:
        dc = (dc // 128) * 128        # keep chunked blocks lane-aligned
        if dc < 128:
            dc = D
    g_d = pl.cdiv(D, dc)

    # --- Row tile, sized against generation-specific VMEM budgets.
    budget, vmem_limit = _vmem_budgets()
    if row_tile is None:
        tb = _choose_row_tile(B, dc, itemsize, budget)
    else:
        rt = max(8, min(int(row_tile), B))
        if rt >= B:
            tb = B
        elif rt >= 128:
            tb = (rt // 128) * 128
        else:
            tb = (rt // 8) * 8
    g_b = pl.cdiv(B, tb)

    kernel = functools.partial(
        _ccc_stats_kernel, batch=B, d=D, row_tile=tb, d_chunk=dc)

    stats = pl.pallas_call(
        kernel,
        out_shape=jax.ShapeDtypeStruct((g_b, 8, tb), jnp.float32),
        grid=(g_b, g_d),
        in_specs=[
            pl.BlockSpec((tb, dc), lambda i, j: (i, j)),
            pl.BlockSpec((tb, dc), lambda i, j: (i, j)),
        ],
        out_specs=pl.BlockSpec((1, 8, tb), lambda i, j: (i, 0, 0)),
        compiler_params=pltpu.CompilerParams(
            dimension_semantics=("parallel", "arbitrary"),
            vmem_limit_bytes=vmem_limit,
        ),
    )(inputs, targets)

    # ---- tiny JAX epilogue over (B,)-sized vectors ------------------------
    sx = stats[:, 0, :].reshape(-1)[:B]
    sy = stats[:, 1, :].reshape(-1)[:B]
    sxx = stats[:, 2, :].reshape(-1)[:B]
    syy = stats[:, 3, :].reshape(-1)[:B]
    sxy = stats[:, 4, :].reshape(-1)[:B]

    d = float(D)
    n = float(B * D)

    # Per-row centered moments / pcc (CosineSimilarity(dim=1, eps)).
    # NOTE: like nn.CosineSimilarity's documented formula, each norm is
    # clamped at eps (ATen clamps the product; differs only for ~zero rows).
    mx_r = sx / d
    my_r = sy / d
    na2 = jnp.maximum(sxx - sx * mx_r, 0.0)    # sum((x - rowmean_x)^2)
    nb2 = jnp.maximum(syy - sy * my_r, 0.0)
    dot = sxy - sx * my_r                      # sum((x-mx)*(y-my))
    na = jnp.maximum(jnp.sqrt(na2), eps)
    nb = jnp.maximum(jnp.sqrt(nb2), eps)
    pcc = dot / (na * nb)

    # Global mean / unbiased var via Chan-style combine of per-row moments.
    mean_x = jnp.sum(sx) / n
    mean_y = jnp.sum(sy) / n
    m2x = jnp.sum(na2) + d * jnp.sum((mx_r - mean_x) ** 2)
    m2y = jnp.sum(nb2) + d * jnp.sum((my_r - mean_y) ** 2)
    var_x = m2x / (n - 1.0)
    var_y = m2y / (n - 1.0)

    denom = var_x + var_y + (mean_y - mean_x) ** 2 + eps
    ccc = 2.0 * pcc * jnp.sqrt(var_x) * jnp.sqrt(var_y) / denom
    return 1.0 - ccc


def _reference(inputs, targets):
    """Plain-JAX reference mirroring the PyTorch module (for validation)."""
    x = inputs.astype(jnp.float32)
    y = targets.astype(jnp.float32)
    n = x.size
    xm, ym = jnp.mean(x), jnp.mean(y)
    xv = jnp.sum((x - xm) ** 2) / (n - 1)
    yv = jnp.sum((y - ym) ** 2) / (n - 1)
    xs, ys = jnp.sqrt(xv), jnp.sqrt(yv)
    a = x - jnp.mean(x, axis=1, keepdims=True)
    b = y - jnp.mean(y, axis=1, keepdims=True)
    pcc = jnp.sum(a * b, axis=1) / (
        jnp.maximum(jnp.linalg.norm(a, axis=1), EPS)
        * jnp.maximum(jnp.linalg.norm(b, axis=1), EPS)
    )
    ccc = 2 * pcc * xs * ys / (xv + yv + (ym - xm) ** 2 + EPS)
    return 1.0 - ccc


if __name__ == "__main__":
    key = jax.random.PRNGKey(0)
    kx, ky = jax.random.split(key)

    loss_fn = jax.jit(concordance_cc_loss,
                      static_argnames=("eps", "row_tile", "d_chunk"))

    def check(x, y, **kw):
        out = jax.block_until_ready(loss_fn(x, y, **kw))
        ref = _reference(x, y)
        assert out.shape == (x.shape[0],)
        assert jnp.allclose(out, ref, atol=2e-3, rtol=2e-3), (out, ref)
        return out

    # 1) Small single-tile, single-chunk problem: batch=8 rows, D=256 features.
    B, D = 8, 256
    x = jax.random.normal(kx, (B, D), dtype=jnp.float32)
    y = 0.7 * x + 0.3 * jax.random.normal(ky, (B, D), dtype=jnp.float32)
    check(x, y)

    # 2) Multi-row-tile grid with a ragged last tile (no host-side padding).
    B2, D2 = 20, 256
    x2 = jax.random.normal(kx, (B2, D2), dtype=jnp.float32)
    y2 = 0.5 * x2 + 0.5 * jax.random.normal(ky, (B2, D2), dtype=jnp.float32)
    check(x2, y2, row_tile=8)

    # 3) D-chunked reduction path with a ragged last D chunk (column masking).
    B3, D3 = 16, 448
    x3 = jax.random.normal(kx, (B3, D3), dtype=jnp.float32)
    y3 = 0.6 * x3 + 0.4 * jax.random.normal(ky, (B3, D3), dtype=jnp.float32)
    check(x3, y3, d_chunk=128)

    # 4) Longer D-chunk loop + bf16 input streaming (half the HBM traffic).
    B4, D4 = 16, 1280
    x4 = jax.random.normal(kx, (B4, D4), dtype=jnp.float32).astype(jnp.bfloat16)
    y4 = (0.5 * x4.astype(jnp.float32)
          + 0.5 * jax.random.normal(ky, (B4, D4), dtype=jnp.float32)
          ).astype(jnp.bfloat16)
    check(x4, y4, d_chunk=128)

    print("KERNEL_OK")
</pallas_src>

<mosaic_0001>
module attributes {stable_mosaic.version = 11 : i64} {
  func.func @_ccc_stats_kernel(%arg0: i32, %arg1: i32, %arg2: memref<8x256xf32, #tpu.memory_space<vmem>>, %arg3: memref<8x256xf32, #tpu.memory_space<vmem>>, %arg4: memref<1x8x8xf32, #tpu.memory_space<vmem>>) attributes {dimension_semantics = [#tpu.dimension_semantics<parallel>, #tpu.dimension_semantics<arbitrary>], iteration_bounds = array<i64: 1, 1>, scalar_prefetch = 0 : i64, scratch_operands = 0 : i64, tpu.core_type = #tpu.core_type<tc>, window_params = [{transform_indices = @transform_0, window_bounds = array<i64: 8, 256>}, {transform_indices = @transform_1, window_bounds = array<i64: 8, 256>}, {transform_indices = @transform_2, window_bounds = array<i64: 1, 8, 8>}]} {
    %c0_i32 = arith.constant 0 : i32
    %0 = arith.cmpi eq, %arg1, %c0_i32 : i32
    %1 = arith.extui %0 : i1 to i32
    %c0_i32_0 = arith.constant 0 : i32
    %2 = arith.cmpi ne, %1, %c0_i32_0 : i32
    scf.if %2 {
      %cst_15 = arith.constant 0.000000e+00 : f32
      %26 = vector.broadcast %cst_15 : f32 to vector<1x8x8xf32>
      %c0_16 = arith.constant 0 : index
      %c0_17 = arith.constant 0 : index
      %c0_18 = arith.constant 0 : index
      %27 = vector.load %arg4[%c0_16, %c0_17, %c0_18] : memref<1x8x8xf32, #tpu.memory_space<vmem>>, vector<1x8x8xf32>
      tpu.vector_store %arg4[%c0_16, %c0_17, %c0_18], %26 {strides = array<i32>} : memref<1x8x8xf32, #tpu.memory_space<vmem>>, vector<1x8x8xf32>,
    } else {
    }
    %c0 = arith.constant 0 : index
    %c0_1 = arith.constant 0 : index
    %3 = vector.load %arg2[%c0, %c0_1] : memref<8x256xf32, #tpu.memory_space<vmem>>, vector<8x256xf32>
    %c0_2 = arith.constant 0 : index
    %c0_3 = arith.constant 0 : index
    %4 = vector.load %arg3[%c0_2, %c0_3] : memref<8x256xf32, #tpu.memory_space<vmem>>, vector<8x256xf32>
    %cst = arith.constant dense<0.000000e+00> : vector<8xf32>
    %5 = vector.multi_reduction <add>, %3, %cst [1] : vector<8x256xf32> to vector<8xf32>
    %cst_4 = arith.constant dense<0.000000e+00> : vector<8xf32>
    %6 = vector.multi_reduction <add>, %4, %cst_4 [1] : vector<8x256xf32> to vector<8xf32>
    %7 = arith.mulf %3, %3 : vector<8x256xf32>
    %cst_5 = arith.constant dense<0.000000e+00> : vector<8xf32>
    %8 = vector.multi_reduction <add>, %7, %cst_5 [1] : vector<8x256xf32> to vector<8xf32>
    %9 = arith.mulf %4, %4 : vector<8x256xf32>
    %cst_6 = arith.constant dense<0.000000e+00> : vector<8xf32>
    %10 = vector.multi_reduction <add>, %9, %cst_6 [1] : vector<8x256xf32> to vector<8xf32>
    %11 = arith.mulf %3, %4 : vector<8x256xf32>
    %cst_7 = arith.constant dense<0.000000e+00> : vector<8xf32>
    %12 = vector.multi_reduction <add>, %11, %cst_7 [1] : vector<8x256xf32> to vector<8xf32>
    %13 = vector.shape_cast %5 : vector<8xf32> to vector<1x8xf32>
    %14 = vector.shape_cast %6 : vector<8xf32> to vector<1x8xf32>
    %15 = vector.shape_cast %8 : vector<8xf32> to vector<1x8xf32>
    %16 = vector.shape_cast %10 : vector<8xf32> to vector<1x8xf32>
    %17 = vector.shape_cast %12 : vector<8xf32> to vector<1x8xf32>
    %cst_8 = arith.constant 0.000000e+00 : f32
    %18 = vector.broadcast %cst_8 : f32 to vector<3x8xf32>
    %19 = tpu.concatenate %13, %14, %15, %16, %17, %18 in 0 : vector<1x8xf32>, vector<1x8xf32>, vector<1x8xf32>, vector<1x8xf32>, vector<1x8xf32>, vector<3x8xf32> -> vector<8x8xf32>
    %c0_9 = arith.constant 0 : index
    %c0_10 = arith.constant 0 : index
    %c0_11 = arith.constant 0 : index
    %20 = vector.load %arg4[%c0_9, %c0_10, %c0_11] : memref<1x8x8xf32, #tpu.memory_space<vmem>>, vector<1x8x8xf32>
    %21 = vector.shape_cast %20 : vector<1x8x8xf32> to vector<8x8xf32>
    %22 = arith.addf %21, %19 : vector<8x8xf32>
    %c0_12 = arith.constant 0 : index
    %c0_13 = arith.constant 0 : index
    %c0_14 = arith.constant 0 : index
    %23 = vector.load %arg4[%c0_12, %c0_13, %c0_14] : memref<1x8x8xf32, #tpu.memory_space<vmem>>, vector<1x8x8xf32>
    %24 = vector.shape_cast %23 : vector<1x8x8xf32> to vector<8x8xf32>
    %25 = vector.shape_cast %22 : vector<8x8xf32> to vector<1x8x8xf32>
    tpu.vector_store %arg4[%c0_12, %c0_13, %c0_14], %25 {strides = array<i32>} : memref<1x8x8xf32, #tpu.memory_space<vmem>>, vector<1x8x8xf32>,
    return
  }
  func.func @transform_0(%arg0: i32, %arg1: i32) -> (i32, i32) {
    %c0_i32 = arith.constant 0 : i32
    return %arg0, %arg1 : i32, i32
  }
  func.func @transform_1(%arg0: i32, %arg1: i32) -> (i32, i32) {
    %c0_i32 = arith.constant 0 : i32
    return %arg0, %arg1 : i32, i32
  }
  func.func @transform_2(%arg0: i32, %arg1: i32) -> (i32, i32, i32) {
    %c0_i32 = arith.constant 0 : i32
    %c0_i32_0 = arith.constant 0 : i32
    %c0_i32_1 = arith.constant 0 : i32
    return %arg0, %c0_i32, %c0_i32_0 : i32, i32, i32
  }
}

</mosaic_0001>

<llo_original>
// kernel: concordance_cc_loss.1
$region0: #{concordance_cc_loss.1}
  #allocation0 [shape = 'u32[]', space=smem, size = 0x4, offset = 0x4, fixed_abs, tag = 'smem constant byte address 0x4 - core index']
  #allocation1 [shape = 'u32[144,128]{1,0:T(1,128)}', space=vmem, size = 0x12000, scoped, tag = 'internal scratch']
  %s0 = inlined_call_operand.hbm [shape: f32[8,256], index: 0, kind: input, shape index: {}]
  %s1 = inlined_call_operand.hbm [shape: f32[8,256], index: 1, kind: input, shape index: {}]
  %s2 = inlined_call_operand.vmem [shape: f32[1,8,8], index: 2, kind: output, shape index: {}]
  %s3 = sld [smem:[#allocation0]]
  $region30: #{concordance_cc_loss.1} parent=0
    _
  %s5 = ssub.s32 1, %s3
  %s6 = scalar_select 0, %s5, %s3
  $region1: #{concordance_cc_loss.1} parent=0
    #allocation2 [shape = 'u8[8192]{0}', space=vmem, size = 0x2000, scoped, tag = 'input window, operand 0, single buffered']
    #allocation3 [shape = 's32[1]{0}', space=sflag, size = 0x4, scoped, tag = 'scoped memory for concordance_cc_loss.1']
    #allocation4 [shape = 'u8[8192]{0}', space=vmem, size = 0x2000, scoped, tag = 'input window, operand 1, single buffered']
    #allocation5 [shape = 's32[1]{0}', space=sflag, size = 0x4, scoped, tag = 'scoped memory for concordance_cc_loss.1']
    %7 = vsyncpa [#allocation3], 0
    %8 = vsyncpa [#allocation5], 0
    // Predicated region
    $region2: #{concordance_cc_loss.1} parent=1 // pred_check
      _
    $region3: #{concordance_cc_loss.1} parent=1 // pred_check_branch
      %10 = sbr.rel (0) target = $region5
    $region4: #{concordance_cc_loss.1} parent=1 // pred_region
      %s12 = ssub.s32 256, 256
      %13 = vsyncadd [#allocation3], %s12
      %s15 = sshll.u32 [#allocation2], 4
      %s16 = int_to_ptr.vmem [resolvable:$true] %s15
      %18 = dma.hbm_to_vmem [thread:$0]  %s0, 256, %s16, [#allocation3]
    $region5: #{concordance_cc_loss.1} parent=1 // pred_fallthru
      _
    // Predicated region
    $region6: #{concordance_cc_loss.1} parent=1 // pred_check
      _
    $region7: #{concordance_cc_loss.1} parent=1 // pred_check_branch
      %20 = sbr.rel (0) target = $region9
    $region8: #{concordance_cc_loss.1} parent=1 // pred_region
      %s22 = ssub.s32 256, 256
      %23 = vsyncadd [#allocation5], %s22
      %s25 = sshll.u32 [#allocation4], 4
      %s26 = int_to_ptr.vmem [resolvable:$true] %s25
      %28 = dma.hbm_to_vmem [thread:$0]  %s1, 256, %s26, [#allocation5]
    $region9: #{concordance_cc_loss.1} parent=1 // pred_fallthru
      _
    // Predicated region
    $region10: #{concordance_cc_loss.1} parent=1 // pred_check
      _
    $region11: #{concordance_cc_loss.1} parent=1 // pred_check_branch
      %30 = sbr.rel (0) target = $region13
    $region12: #{concordance_cc_loss.1} parent=1 // pred_region
      %31 = dma.done [#allocation3], 256
    $region13: #{concordance_cc_loss.1} parent=1 // pred_fallthru
      _
    // Predicated region
    $region14: #{concordance_cc_loss.1} parent=1 // pred_check
      _
    $region15: #{concordance_cc_loss.1} parent=1 // pred_check_branch
      %33 = sbr.rel (0) target = $region17
    $region16: #{concordance_cc_loss.1} parent=1 // pred_region
      %34 = dma.done [#allocation5], 256
    $region17: #{concordance_cc_loss.1} parent=1 // pred_fallthru
      _
    %p35 = scmp.eq.s32.totalorder 0, 0
    // Predicated region
    $region18: #{concordance_cc_loss.1} parent=1 // pred_check
      %p36 = pneg %p35
    $region19: #{concordance_cc_loss.1} parent=1 // pred_check_branch
      %38 = sbr.rel (%p36) target = $region21
    $region20: #{concordance_cc_loss.1} parent=1 // pred_region
      %vm39 = vcmask 64512
      %40 = vst.msk [vmem:[%s2] sm:$0xff] %vm39, 0.0
    $region21: #{concordance_cc_loss.1} parent=1 // pred_fallthru
      _
    %v41 = vld [vmem:[#allocation2] sm:$0xff]
    %v42 = vld [vmem:[#allocation2 + $0x8] sm:$0xff]
    %v43 = vld [vmem:[#allocation4] sm:$0xff]
    %v44 = vld [vmem:[#allocation4 + $0x8] sm:$0xff]
    %v45 = vadd.f32 %v41, %v42
    %46 = vadd.xlane.f32.xlu0 %v45
    %v47 = vpop.xlane.xlu0 %46
    %v48 = vadd.f32 %v43, %v44
    %49 = vadd.xlane.f32.xlu0 %v48
    %v50 = vpop.xlane.xlu0 %49
    %v51 = vmul.f32 %v41, %v41
    %v52 = vmul.f32 %v42, %v42
    %v53 = vadd.f32 %v51, %v52
    %54 = vadd.xlane.f32.xlu0 %v53
    %v55 = vpop.xlane.xlu0 %54
    %v56 = vmul.f32 %v43, %v43
    %v57 = vmul.f32 %v44, %v44
    %v58 = vadd.f32 %v56, %v57
    %59 = vadd.xlane.f32.xlu0 %v58
    %v60 = vpop.xlane.xlu0 %59
    %v61 = vmul.f32 %v41, %v43
    %v62 = vmul.f32 %v42, %v44
    %v63 = vadd.f32 %v61, %v62
    %64 = vadd.xlane.f32.xlu0 %v63
    %v65 = vpop.xlane.xlu0 %64
    %v67 = vlaneseq
    %v68 = vand.u32 %v67, 127
    %v69 = vlaneseq
    %v70 = vshrl.u32 %v69, 7
    %v71 = vsub.s32 %v68, %v70
    %v72 = vrot.slane %v47, %v71
    %v75 = vlaneseq
    %v76 = vshrl.u32 %v75, 7
    %v77 = vsub.s32 %v68, %v76
    %v78 = vrot.slane %v50, %v77
    %v81 = vlaneseq
    %v82 = vshrl.u32 %v81, 7
    %v83 = vsub.s32 %v68, %v82
    %v84 = vrot.slane %v55, %v83
    %v87 = vlaneseq
    %v88 = vshrl.u32 %v87, 7
    %v89 = vsub.s32 %v68, %v88
    %v90 = vrot.slane %v60, %v89
    %v93 = vlaneseq
    %v94 = vshrl.u32 %v93, 7
    %v95 = vsub.s32 %v68, %v94
    %v96 = vrot.slane %v65, %v95
    %vm98 = vcmask 1040384
    %v99 = vsel %vm98, %v72, %v78
    %vm100 = vcmask 1041408
    %v101 = vsel %vm100, %v99, %v84
    %vm102 = vcmask 1042432
    %v103 = vsel %vm102, %v101, %v90
    %vm104 = vcmask 1043456
    %v105 = vsel %vm104, %v103, %v96
    %vm106 = vcmask 1044480
    %v107 = vsel %vm106, %v105, 0.0
    %v108 = vld [vmem:[%s2] sm:$0xff]
    %v109 = vadd.f32 %v108, %v107
    %vm110 = vcmask 64512
    %111 = vst.msk [vmem:[%s2] sm:$0xff] %vm110, %v109
    // Predicated region
    $region22: #{concordance_cc_loss.1} parent=1 // pred_check
      _
    $region23: #{concordance_cc_loss.1} parent=1 // pred_check_branch
      %113 = sbr.rel (0) target = $region25
    $region24: #{concordance_cc_loss.1} parent=1 // pred_region
      _
    $region25: #{concordance_cc_loss.1} parent=1 // pred_fallthru
      _
    // Predicated region
    $region26: #{concordance_cc_loss.1} parent=1 // pred_check
      _
    $region27: #{concordance_cc_loss.1} parent=1 // pred_check_branch
      %115 = sbr.rel (0) target = $region29
    $region28: #{concordance_cc_loss.1} parent=1 // pred_region
      _
    $region29: #{concordance_cc_loss.1} parent=1 // pred_fallthru
      _
    %116 = vsyncpa [#allocation3], 1
    %117 = vsyncpa [#allocation5], 1

</llo_original>
